<compile_context>
chip_gen: v7x
topology: tpu7x:2x2x1
jax: 0.10.0
libtpu: 0.0.40
codegen_flags: <defaults>
</compile_context>

<pallas_src>
import jax
import jax.numpy as jnp
from jax.experimental import pallas as pl
from jax.experimental.pallas import tpu as pltpu

_LANE = 128        # TPU lane width; fc2 output is padded to this
_SUBLANE = 16      # row-tile granularity (covers bf16 sublane packing)


def _round_up(n, m):
    return ((n + m - 1) // m) * m


def soft_q_kernel(x_ref, a_ref, w1x_ref, w1a_ref, b1_ref, w2_ref, b2_ref, o_ref):
    # fc1 on the (implicit) concatenation [x, a]:
    #   cat([x, a], 1) @ W1 = x @ W1[:state_size] + a @ W1[state_size:]
    h = (
        jnp.dot(x_ref[...], w1x_ref[...], preferred_element_type=jnp.float32)
        + jnp.dot(a_ref[...], w1a_ref[...], preferred_element_type=jnp.float32)
        + b1_ref[...]
    )
    # ReLU epilogue in f32 (VPU path; v5e has no bf16 VPU).
    h = jnp.maximum(h, 0.0)
    # fc2 (output dimension padded to 128 lanes -> lane-dense store).
    out = (
        jnp.dot(h.astype(w2_ref.dtype), w2_ref[...], preferred_element_type=jnp.float32)
        + b2_ref[...]
    )
    o_ref[...] = out.astype(o_ref.dtype)


def soft_q_forward(x, a, params, *, tile_b=512, compute_dtype=jnp.bfloat16):
    """x: (B, state_size), a: (B, action_size) -> (B, action_size)."""
    w1x, w1a, b1, w2, b2 = params
    batch, state_size = x.shape
    action_size = a.shape[1]
    hidden = w2.shape[0]
    out_features = w2.shape[1]

    # --- lane-dense output: pad fc2 out dim up to a multiple of 128 lanes ---
    out_pad = _round_up(out_features, _LANE)
    w2p = jnp.pad(w2, ((0, 0), (0, out_pad - out_features)))
    b2p = jnp.pad(b2, ((0, 0), (0, out_pad - out_features)))

    # --- dtype plumbing: streamed inputs + matmul weights in compute_dtype,
    #     biases / epilogue in f32 ---
    xd = x.astype(compute_dtype)
    ad = a.astype(compute_dtype)
    w1xd = w1x.astype(compute_dtype)
    w1ad = w1a.astype(compute_dtype)
    w2d = w2p.astype(compute_dtype)
    b1f = b1.astype(jnp.float32)
    b2f = b2p.astype(jnp.float32)

    # --- batch tiling: pick the largest tile (<= tile_b) that the batch needs,
    #     multiple of 16 rows, and pad the batch to a whole number of tiles ---
    eff_tile = max(_SUBLANE, min(_round_up(tile_b, _SUBLANE),
                                 _round_up(batch, _SUBLANE)))
    batch_pad = _round_up(batch, eff_tile)
    if batch_pad != batch:
        xd = jnp.pad(xd, ((0, batch_pad - batch), (0, 0)))
        ad = jnp.pad(ad, ((0, batch_pad - batch), (0, 0)))
    grid = (batch_pad // eff_tile,)

    out = pl.pallas_call(
        soft_q_kernel,
        out_shape=jax.ShapeDtypeStruct((batch_pad, out_pad), jnp.float32),
        grid_spec=pltpu.PrefetchScalarGridSpec(
            num_scalar_prefetch=0,
            grid=grid,
            in_specs=[
                # streamed per-tile activations
                pl.BlockSpec((eff_tile, state_size), lambda i: (i, 0)),
                pl.BlockSpec((eff_tile, action_size), lambda i: (i, 0)),
                # weights/biases: constant index_map -> resident in VMEM
                pl.BlockSpec((state_size, hidden), lambda i: (0, 0)),
                pl.BlockSpec((action_size, hidden), lambda i: (0, 0)),
                pl.BlockSpec((1, hidden), lambda i: (0, 0)),
                pl.BlockSpec((hidden, out_pad), lambda i: (0, 0)),
                pl.BlockSpec((1, out_pad), lambda i: (0, 0)),
            ],
            out_specs=pl.BlockSpec((eff_tile, out_pad), lambda i: (i, 0)),
        ),
        compiler_params=pltpu.CompilerParams(
            dimension_semantics=("parallel",),        # shard batch tiles on v7x's 2 TCs
            vmem_limit_bytes=32 * 1024 * 1024,        # safe on v7x's 64 MiB VMEM
        ),
    )(xd, ad, w1xd, w1ad, b1f, w2d, b2f)

    # Drop batch padding and the padded output lanes.
    return out[:batch, :out_features]


def init_params(key, state_size, action_size, hidden=128):
    """Deterministic init mimicking nn.Linear's U(-1/sqrt(fan_in), +1/sqrt(fan_in)).

    Weights are stored transposed, i.e. (in_features, out_features)."""
    k1, k2, k3, k4 = jax.random.split(key, 4)
    in1 = state_size + action_size
    bound1 = 1.0 / jnp.sqrt(in1)
    bound2 = 1.0 / jnp.sqrt(hidden)

    w1 = jax.random.uniform(k1, (in1, hidden), jnp.float32, -bound1, bound1)
    b1 = jax.random.uniform(k2, (1, hidden), jnp.float32, -bound1, bound1)
    w1x = w1[:state_size, :]
    w1a = w1[state_size:, :]

    w2 = jax.random.uniform(k3, (hidden, action_size), jnp.float32, -bound2, bound2)
    b2 = jax.random.uniform(k4, (1, action_size), jnp.float32, -bound2, bound2)

    return (w1x, w1a, b1, w2, b2)


def reference_forward(x, a, params):
    """Pure-JAX f32 reference matching the PyTorch module exactly."""
    w1x, w1a, b1, w2, b2 = params
    w1 = jnp.concatenate([w1x, w1a], axis=0)
    xa = jnp.concatenate([x, a], axis=1)
    h = jax.nn.relu(xa @ w1 + b1)
    return h @ w2 + b2


if __name__ == "__main__":
    batch, state_size, action_size = 2, 8, 4

    key = jax.random.PRNGKey(0)
    kx, ka, kp = jax.random.split(key, 3)

    x = jax.random.normal(kx, (batch, state_size), jnp.float32)
    a = jax.random.normal(ka, (batch, action_size), jnp.float32)
    params = init_params(kp, state_size, action_size)

    ref = reference_forward(x, a, params)

    # f32 path: tight check against the reference.
    out_f32 = jax.block_until_ready(
        soft_q_forward(x, a, params, compute_dtype=jnp.float32)
    )
    assert out_f32.shape == (batch, action_size)
    assert jnp.allclose(out_f32, ref, atol=1e-4, rtol=1e-4), (out_f32, ref)

    # bf16 streaming path (default / fast path): looser tolerance.
    out_bf16 = jax.block_until_ready(soft_q_forward(x, a, params))
    assert out_bf16.shape == (batch, action_size)
    assert jnp.allclose(out_bf16, ref, atol=3e-2, rtol=3e-2), (out_bf16, ref)

    print("KERNEL_OK")
</pallas_src>

<mosaic_0001>
module attributes {stable_mosaic.version = 11 : i64} {
  func.func @soft_q_kernel(%arg0: i32, %arg1: memref<16x8xf32, #tpu.memory_space<vmem>>, %arg2: memref<16x4xf32, #tpu.memory_space<vmem>>, %arg3: memref<8x128xf32, #tpu.memory_space<vmem>>, %arg4: memref<4x128xf32, #tpu.memory_space<vmem>>, %arg5: memref<1x128xf32, #tpu.memory_space<vmem>>, %arg6: memref<128x128xf32, #tpu.memory_space<vmem>>, %arg7: memref<1x128xf32, #tpu.memory_space<vmem>>, %arg8: memref<16x128xf32, #tpu.memory_space<vmem>>) attributes {dimension_semantics = [#tpu.dimension_semantics<parallel>], iteration_bounds = array<i64: 1>, scalar_prefetch = 0 : i64, scratch_operands = 0 : i64, tpu.core_type = #tpu.core_type<tc>, window_params = [{transform_indices = @transform_0, window_bounds = array<i64: 16, 8>}, {transform_indices = @transform_1, window_bounds = array<i64: 16, 4>}, {pipeline_mode = #tpu.pipeline_mode<synchronous>, transform_indices = @transform_2, window_bounds = array<i64: 8, 128>}, {pipeline_mode = #tpu.pipeline_mode<synchronous>, transform_indices = @transform_3, window_bounds = array<i64: 4, 128>}, {pipeline_mode = #tpu.pipeline_mode<synchronous>, transform_indices = @transform_4, window_bounds = array<i64: 1, 128>}, {pipeline_mode = #tpu.pipeline_mode<synchronous>, transform_indices = @transform_5, window_bounds = array<i64: 128, 128>}, {pipeline_mode = #tpu.pipeline_mode<synchronous>, transform_indices = @transform_6, window_bounds = array<i64: 1, 128>}, {transform_indices = @transform_7, window_bounds = array<i64: 16, 128>}]} {
    %c0 = arith.constant 0 : index
    %c0_0 = arith.constant 0 : index
    %0 = vector.load %arg1[%c0, %c0_0] : memref<16x8xf32, #tpu.memory_space<vmem>>, vector<16x8xf32>
    %c0_1 = arith.constant 0 : index
    %c0_2 = arith.constant 0 : index
    %1 = vector.load %arg3[%c0_1, %c0_2] : memref<8x128xf32, #tpu.memory_space<vmem>>, vector<8x128xf32>
    %cst = arith.constant dense<0.000000e+00> : vector<16x128xf32>
    %2 = tpu.matmul %0, %1, %cst {dimension_numbers = #tpu.dot_dimension_numbers<[1], [0], [0], [1], [0, 0, 1, 1], [], []>} : vector<16x8xf32>, vector<8x128xf32>, vector<16x128xf32> -> vector<16x128xf32>
    %c0_3 = arith.constant 0 : index
    %c0_4 = arith.constant 0 : index
    %3 = vector.load %arg2[%c0_3, %c0_4] : memref<16x4xf32, #tpu.memory_space<vmem>>, vector<16x4xf32>
    %c0_5 = arith.constant 0 : index
    %c0_6 = arith.constant 0 : index
    %4 = vector.load %arg4[%c0_5, %c0_6] : memref<4x128xf32, #tpu.memory_space<vmem>>, vector<4x128xf32>
    %cst_7 = arith.constant dense<0.000000e+00> : vector<16x128xf32>
    %5 = tpu.matmul %3, %4, %cst_7 {dimension_numbers = #tpu.dot_dimension_numbers<[1], [0], [0], [1], [0, 0, 1, 1], [], []>} : vector<16x4xf32>, vector<4x128xf32>, vector<16x128xf32> -> vector<16x128xf32>
    %6 = arith.addf %2, %5 : vector<16x128xf32>
    %c0_8 = arith.constant 0 : index
    %c0_9 = arith.constant 0 : index
    %7 = vector.load %arg5[%c0_8, %c0_9] : memref<1x128xf32, #tpu.memory_space<vmem>>, vector<1x128xf32>
    %8 = vector.broadcast %7 : vector<1x128xf32> to vector<16x128xf32>
    %9 = arith.addf %6, %8 : vector<16x128xf32>
    %cst_10 = arith.constant 0.000000e+00 : f32
    %10 = vector.broadcast %cst_10 : f32 to vector<16x128xf32>
    %11 = arith.maximumf %9, %10 : vector<16x128xf32>
    %c0_11 = arith.constant 0 : index
    %c0_12 = arith.constant 0 : index
    %12 = vector.load %arg6[%c0_11, %c0_12] : memref<128x128xf32, #tpu.memory_space<vmem>>, vector<128x128xf32>
    %cst_13 = arith.constant dense<0.000000e+00> : vector<16x128xf32>
    %13 = tpu.matmul %11, %12, %cst_13 {dimension_numbers = #tpu.dot_dimension_numbers<[1], [0], [0], [1], [0, 0, 1, 1], [], []>} : vector<16x128xf32>, vector<128x128xf32>, vector<16x128xf32> -> vector<16x128xf32>
    %c0_14 = arith.constant 0 : index
    %c0_15 = arith.constant 0 : index
    %14 = vector.load %arg7[%c0_14, %c0_15] : memref<1x128xf32, #tpu.memory_space<vmem>>, vector<1x128xf32>
    %15 = vector.broadcast %14 : vector<1x128xf32> to vector<16x128xf32>
    %16 = arith.addf %13, %15 : vector<16x128xf32>
    %c0_16 = arith.constant 0 : index
    %c0_17 = arith.constant 0 : index
    %17 = vector.load %arg8[%c0_16, %c0_17] : memref<16x128xf32, #tpu.memory_space<vmem>>, vector<16x128xf32>
    tpu.vector_store %arg8[%c0_16, %c0_17], %16 {strides = array<i32>} : memref<16x128xf32, #tpu.memory_space<vmem>>, vector<16x128xf32>,
    return
  }
  func.func @transform_0(%arg0: i32) -> (i32, i32) {
    %c0_i32 = arith.constant 0 : i32
    %c0_i32_0 = arith.constant 0 : i32
    return %arg0, %c0_i32 : i32, i32
  }
  func.func @transform_1(%arg0: i32) -> (i32, i32) {
    %c0_i32 = arith.constant 0 : i32
    %c0_i32_0 = arith.constant 0 : i32
    return %arg0, %c0_i32 : i32, i32
  }
  func.func @transform_2(%arg0: i32) -> (i32, i32) {
    %c0_i32 = arith.constant 0 : i32
    %c0_i32_0 = arith.constant 0 : i32
    %c0_i32_1 = arith.constant 0 : i32
    return %c0_i32, %c0_i32_0 : i32, i32
  }
  func.func @transform_3(%arg0: i32) -> (i32, i32) {
    %c0_i32 = arith.constant 0 : i32
    %c0_i32_0 = arith.constant 0 : i32
    %c0_i32_1 = arith.constant 0 : i32
    return %c0_i32, %c0_i32_0 : i32, i32
  }
  func.func @transform_4(%arg0: i32) -> (i32, i32) {
    %c0_i32 = arith.constant 0 : i32
    %c0_i32_0 = arith.constant 0 : i32
    %c0_i32_1 = arith.constant 0 : i32
    return %c0_i32, %c0_i32_0 : i32, i32
  }
  func.func @transform_5(%arg0: i32) -> (i32, i32) {
    %c0_i32 = arith.constant 0 : i32
    %c0_i32_0 = arith.constant 0 : i32
    %c0_i32_1 = arith.constant 0 : i32
    return %c0_i32, %c0_i32_0 : i32, i32
  }
  func.func @transform_6(%arg0: i32) -> (i32, i32) {
    %c0_i32 = arith.constant 0 : i32
    %c0_i32_0 = arith.constant 0 : i32
    %c0_i32_1 = arith.constant 0 : i32
    return %c0_i32, %c0_i32_0 : i32, i32
  }
  func.func @transform_7(%arg0: i32) -> (i32, i32) {
    %c0_i32 = arith.constant 0 : i32
    %c0_i32_0 = arith.constant 0 : i32
    return %arg0, %c0_i32 : i32, i32
  }
}

</mosaic_0001>

<llo_original>
// kernel: tpu_custom_call.1
$region0: #{tpu_custom_call.1}
  #allocation0 [shape = 'u32[]', space=smem, size = 0x4, offset = 0x4, fixed_abs, tag = 'smem constant byte address 0x4 - core index']
  #allocation1 [shape = 'u32[144,128]{1,0:T(1,128)}', space=vmem, size = 0x12000, scoped, tag = 'internal scratch']
  %s0 = inlined_call_operand.vmem [shape: f32[16,8], index: 0, kind: input, shape index: {}]
  %s1 = inlined_call_operand.vmem [shape: f32[16,4], index: 1, kind: input, shape index: {}]
  %s2 = inlined_call_operand.vmem [shape: f32[8,128], index: 2, kind: input, shape index: {}]
  %s3 = inlined_call_operand.vmem [shape: f32[4,128], index: 3, kind: input, shape index: {}]
  %s4 = inlined_call_operand.vmem [shape: f32[1,128], index: 4, kind: input, shape index: {}]
  %s5 = inlined_call_operand.hbm [shape: f32[128,128], index: 5, kind: input, shape index: {}]
  %s6 = inlined_call_operand.vmem [shape: f32[1,128], index: 6, kind: input, shape index: {}]
  %s7 = inlined_call_operand.hbm [shape: f32[16,128], index: 7, kind: output, shape index: {}]
  %s8 = sld [smem:[#allocation0]]
  $region42: #{tpu_custom_call.1} parent=0
    _
  %s10 = ssub.s32 1, %s8
  %s11 = scalar_select 0, %s10, %s8
  $region1: #{tpu_custom_call.1} parent=0
    #allocation2 [shape = 'u8[65536]{0}', space=vmem, size = 0x10000, scoped, tag = 'input window, operand 5, single buffered']
    #allocation3 [shape = 's32[1]{0}', space=sflag, size = 0x4, scoped, tag = 'scoped memory for tpu_custom_call.1']
    #allocation4 [shape = 's32[1]{0}', space=sflag, size = 0x4, scoped, tag = 'scoped memory for tpu_custom_call.1']
    #allocation5 [shape = 'u8[8192]{0}', space=vmem, size = 0x2000, scoped, tag = 'output window, operand 0, single buffered']
    %12 = vsyncpa [#allocation3], 0
    %13 = vsyncpa [#allocation4], 0
    // Predicated region
    $region2: #{tpu_custom_call.1} parent=1 // pred_check
      _
    $region3: #{tpu_custom_call.1} parent=1 // pred_check_branch
      %15 = sbr.rel (0) target = $region5
    $region4: #{tpu_custom_call.1} parent=1 // pred_region
      _
    $region5: #{tpu_custom_call.1} parent=1 // pred_fallthru
      _
    // Predicated region
    $region6: #{tpu_custom_call.1} parent=1 // pred_check
      _
    $region7: #{tpu_custom_call.1} parent=1 // pred_check_branch
      %17 = sbr.rel (0) target = $region9
    $region8: #{tpu_custom_call.1} parent=1 // pred_region
      _
    $region9: #{tpu_custom_call.1} parent=1 // pred_fallthru
      _
    // Predicated region
    $region10: #{tpu_custom_call.1} parent=1 // pred_check
      _
    $region11: #{tpu_custom_call.1} parent=1 // pred_check_branch
      %19 = sbr.rel (0) target = $region13
    $region12: #{tpu_custom_call.1} parent=1 // pred_region
      _
    $region13: #{tpu_custom_call.1} parent=1 // pred_fallthru
      _
    // Predicated region
    $region14: #{tpu_custom_call.1} parent=1 // pred_check
      _
    $region15: #{tpu_custom_call.1} parent=1 // pred_check_branch
      %21 = sbr.rel (0) target = $region17
    $region16: #{tpu_custom_call.1} parent=1 // pred_region
      _
    $region17: #{tpu_custom_call.1} parent=1 // pred_fallthru
      _
    // Predicated region
    $region18: #{tpu_custom_call.1} parent=1 // pred_check
      _
    $region19: #{tpu_custom_call.1} parent=1 // pred_check_branch
      %23 = sbr.rel (0) target = $region21
    $region20: #{tpu_custom_call.1} parent=1 // pred_region
      _
    $region21: #{tpu_custom_call.1} parent=1 // pred_fallthru
      _
    // Predicated region
    $region22: #{tpu_custom_call.1} parent=1 // pred_check
      _
    $region23: #{tpu_custom_call.1} parent=1 // pred_check_branch
      %25 = sbr.rel (0) target = $region25
    $region24: #{tpu_custom_call.1} parent=1 // pred_region
      %s27 = ssub.s32 2048, 2048
      %28 = vsyncadd [#allocation3], %s27
      %s29 = sshll.u32 [#allocation2], 4
      %s30 = int_to_ptr.vmem [resolvable:$true] %s29
      %35 = dma.hbm_to_vmem [thread:$0]  %s5, 2048, %s30, [#allocation3], 128, 128, 8
    $region25: #{tpu_custom_call.1} parent=1 // pred_fallthru
      _
    // Predicated region
    $region26: #{tpu_custom_call.1} parent=1 // pred_check
      _
    $region27: #{tpu_custom_call.1} parent=1 // pred_check_branch
      %37 = sbr.rel (0) target = $region29
    $region28: #{tpu_custom_call.1} parent=1 // pred_region
      _
    $region29: #{tpu_custom_call.1} parent=1 // pred_fallthru
      _
    // Predicated region
    $region30: #{tpu_custom_call.1} parent=1 // pred_check
      _
    $region31: #{tpu_custom_call.1} parent=1 // pred_check_branch
      %39 = sbr.rel (0) target = $region33
    $region32: #{tpu_custom_call.1} parent=1 // pred_region
      %40 = dma.done [#allocation3], 2048
    $region33: #{tpu_custom_call.1} parent=1 // pred_fallthru
      _
    %v41 = vld [vmem:[%s0] sm:$0xff]
    %v42 = vld [vmem:[%s0 + $0x8] sm:$0xff]
    %v43 = vld [vmem:[%s2] sm:$0xff]
    %v44 = vld [vmem:[%s1] sm:$0xff]
    %v45 = vld [vmem:[%s1 + $0x8] sm:$0xff]
    %v46 = vld [vmem:[%s3] sm:$0xf]
    %vm47 = vcmask 31744
    %v49 = vsel %vm47, %v44, 0
    %v52 = vsel %vm47, %v45, 0
    %vm54 = vcmask 1043456
    %v56 = vsel %vm54, %v46, 0
    %58 = vmatprep.subr.mxu0 0.0
    %59 = vmatpush1.msra.mxu0 %v56
    %60 = vmatprep.subr.mxu0 0.0
    %61 = vmatpush1.msra.mxu0 0.0
    %62 = vmatprep.subr.mxu0 0.0
    %63 = vmatpush1.msra.mxu0 0.0
    %64 = vmatprep.subr.mxu0 0.0
    %65 = vmatpush1.msra.mxu0 0.0
    %66 = vmatprep.subr.mxu0 0.0
    %67 = vmatpush1.msra.mxu0 0.0
    %68 = vmatprep.subr.mxu0 0.0
    %69 = vmatpush1.msra.mxu0 0.0
    %70 = vmatprep.subr.mxu0 0.0
    %71 = vmatpush1.msra.mxu0 0.0
    %72 = vmatprep.subr.mxu0 0.0
    %73 = vmatpush1.msra.mxu0 0.0
    %74 = vmatprep.subr.mxu0 0.0
    %75 = vmatpush1.msra.mxu0 0.0
    %76 = vmatprep.subr.mxu0 0.0
    %77 = vmatpush1.msra.mxu0 0.0
    %78 = vmatprep.subr.mxu0 0.0
    %79 = vmatpush1.msra.mxu0 0.0
    %80 = vmatprep.subr.mxu0 0.0
    %81 = vmatpush1.msra.mxu0 0.0
    %82 = vmatprep.subr.mxu0 0.0
    %83 = vmatpush1.msra.mxu0 0.0
    %84 = vmatprep.subr.mxu0 0.0
    %85 = vmatpush1.msra.mxu0 0.0
    %86 = vmatprep.subr.mxu0 0.0
    %87 = vmatpush1.msra.mxu0 0.0
    %88 = vmatprep.subr.mxu0 0.0
    %89 = vmatpush1.msra.mxu0 0.0
    %90 = vmatprep.subr.mxu0 0.0
    %91 = vmatpush1.msra.mxu0 0.0
    %92 = vmatprep.subr.mxu0 0.0
    %93 = vmatpush1.msra.mxu0 0.0
    %94 = vmatprep.subr.mxu0 0.0
    %95 = vmatpush1.msra.mxu0 0.0
    %96 = vmatprep.subr.mxu0 0.0
    %97 = vmatpush1.msra.mxu0 0.0
    %98 = vmatprep.subr.mxu0 0.0
    %99 = vmatpush1.msra.mxu0 0.0
    %100 = vmatprep.subr.mxu0 0.0
    %101 = vmatpush1.msra.mxu0 0.0
    %102 = vmatprep.subr.mxu0 0.0
    %103 = vmatpush1.msra.mxu0 0.0
    %104 = vmatprep.subr.mxu0 0.0
    %105 = vmatpush1.msra.mxu0 0.0
    %106 = vmatprep.subr.mxu0 0.0
    %107 = vmatpush1.msra.mxu0 0.0
    %108 = vmatprep.subr.mxu0 0.0
    %109 = vmatpush1.msra.mxu0 0.0
    %110 = vmatprep.subr.mxu0 0.0
    %111 = vmatpush1.msra.mxu0 0.0
    %112 = vmatprep.subr.mxu0 0.0
    %113 = vmatpush1.msra.mxu0 0.0
    %114 = vmatprep.subr.mxu0 0.0
    %115 = vmatpush1.msra.mxu0 0.0
    %116 = vmatprep.subr.mxu0 0.0
    %117 = vmatpush1.msra.mxu0 0.0
    %118 = vmatprep.subr.mxu0 0.0
    %119 = vmatpush1.msra.mxu0 0.0
    %120 = vmatprep.subr.mxu0 0.0
    %121 = vmatpush1.msra.mxu0 0.0
    %122 = vmatprep.mubr.f32.mxu0 0.0
    %123 = vmatmul.mubr.f32.gmra.mrb[0].mxu0 %v49
    %v124 = vpop.f32.mrb[0].mxu0
    %v125 = vadd.f32 0.0, %v124
    %v126 = vpop.f32.mrb[0].mxu0
    %127 = vmatprep.mubr.f32.mxu0 0.0
    %128 = vmatmul.mubr.f32.gmra.mrb[0].mxu0 %v52
    %v129 = vpop.f32.mrb[0].mxu0
    %v130 = vadd.f32 0.0, %v129
    %v131 = vpop.f32.mrb[0].mxu0
    %132 = vdwg.mxu0
    %vm133 = vcmask 64512
    %v135 = vsel %vm133, %v41, 0
    %v138 = vsel %vm133, %v42, 0
    %140 = vmatprep.subr.mxu0 0.0
    %141 = vmatpush1.msra.mxu0 %v43
    %142 = vmatprep.subr.mxu0 0.0
    %143 = vmatpush1.msra.mxu0 0.0
    %144 = vmatprep.subr.mxu0 0.0
    %145 = vmatpush1.msra.mxu0 0.0
    %146 = vmatprep.subr.mxu0 0.0
    %147 = vmatpush1.msra.mxu0 0.0
    %148 = vmatprep.subr.mxu0 0.0
    %149 = vmatpush1.msra.mxu0 0.0
    %150 = vmatprep.subr.mxu0 0.0
    %151 = vmatpush1.msra.mxu0 0.0
    %152 = vmatprep.subr.mxu0 0.0
    %153 = vmatpush1.msra.mxu0 0.0
    %154 = vmatprep.subr.mxu0 0.0
    %155 = vmatpush1.msra.mxu0 0.0
    %156 = vmatprep.subr.mxu0 0.0
    %157 = vmatpush1.msra.mxu0 0.0
    %158 = vmatprep.subr.mxu0 0.0
    %159 = vmatpush1.msra.mxu0 0.0
    %160 = vmatprep.subr.mxu0 0.0
    %161 = vmatpush1.msra.mxu0 0.0
    %162 = vmatprep.subr.mxu0 0.0
    %163 = vmatpush1.msra.mxu0 0.0
    %164 = vmatprep.subr.mxu0 0.0
    %165 = vmatpush1.msra.mxu0 0.0
    %166 = vmatprep.subr.mxu0 0.0
    %167 = vmatpush1.msra.mxu0 0.0
    %168 = vmatprep.subr.mxu0 0.0
    %169 = vmatpush1.msra.mxu0 0.0
    %170 = vmatprep.subr.mxu0 0.0
    %171 = vmatpush1.msra.mxu0 0.0
    %172 = vmatprep.subr.mxu0 0.0
    %173 = vmatpush1.msra.mxu0 0.0
    %174 = vmatprep.subr.mxu0 0.0
    %175 = vmatpush1.msra.mxu0 0.0
    %176 = vmatprep.subr.mxu0 0.0
    %177 = vmatpush1.msra.mxu0 0.0
    %178 = vmatprep.subr.mxu0 0.0
    %179 = vmatpush1.msra.mxu0 0.0
    %180 = vmatprep.subr.mxu0 0.0
    %181 = vmatpush1.msra.mxu0 0.0
    %182 = vmatprep.subr.mxu0 0.0
    %183 = vmatpush1.msra.mxu0 0.0
    %184 = vmatprep.subr.mxu0 0.0
    %185 = vmatpush1.msra.mxu0 0.0
    %186 = vmatprep.subr.mxu0 0.0
    %187 = vmatpush1.msra.mxu0 0.0
    %188 = vmatprep.subr.mxu0 0.0
    %189 = vmatpush1.msra.mxu0 0.0
    %190 = vmatprep.subr.mxu0 0.0
    %191 = vmatpush1.msra.mxu0 0.0
    %192 = vmatprep.subr.mxu0 0.0
    %193 = vmatpush1.msra.mxu0 0.0
    %194 = vmatprep.subr.mxu0 0.0
    %195 = vmatpush1.msra.mxu0 0.0
    %196 = vmatprep.subr.mxu0 0.0
    %197 = vmatpush1.msra.mxu0 0.0
    %198 = vmatprep.subr.mxu0 0.0
    %199 = vmatpush1.msra.mxu0 0.0
    %200 = vmatprep.subr.mxu0 0.0
    %201 = vmatpush1.msra.mxu0 0.0
    %202 = vmatprep.subr.mxu0 0.0
    %203 = vmatpush1.msra.mxu0 0.0
    %204 = vmatprep.mubr.f32.mxu0 0.0
    %205 = vmatmul.mubr.f32.gmra.mrb[0].mxu0 %v135
    %v206 = vpop.f32.mrb[0].mxu0
    %v207 = vadd.f32 %v125, %v206
    %v208 = vpop.f32.mrb[0].mxu0
    %209 = vmatprep.mubr.f32.mxu0 0.0
    %210 = vmatmul.mubr.f32.gmra.mrb[0].mxu0 %v138
    %v211 = vpop.f32.mrb[0].mxu0
    %v212 = vadd.f32 %v130, %v211
    %v213 = vpop.f32.mrb[0].mxu0
    %214 = vdwg.mxu0
    %v215 = vld [vmem:[%s4] sm:$0x1]
    %v217 = vlaneseq
    %v218 = vshrl.u32 %v217, 7
    %v219 = vsub.s32 0, %v218
    %v220 = vrot.slane %v215, %v219
    %v222 = vadd.f32 %v207, %v220
    %v223 = vadd.f32 %v212, %v220
    %v224 = vmax.f32 %v222, 0.0
    %v225 = vmax.f32 %v223, 0.0
    %v226 = vld [vmem:[#allocation2] sm:$0xff]
    %v227 = vld [vmem:[#allocation2 + $0x8] sm:$0xff]
    %v228 = vld [vmem:[#allocation2 + $0x10] sm:$0xff]
    %v229 = vld [vmem:[#allocation2 + $0x18] sm:$0xff]
    %v230 = vld [vmem:[#allocation2 + $0x20] sm:$0xff]
    %v231 = vld [vmem:[#allocation2 + $0x28] sm:$0xff]
    %v232 = vld [vmem:[#allocation2 + $0x30] sm:$0xff]
    %v233 = vld [vmem:[#allocation2 + $0x38] sm:$0xff]
    %v234 = vld [vmem:[#allocation2 + $0x40] sm:$0xff]
    %v235 = vld [vmem:[#allocation2 + $0x48] sm:$0xff]
    %v236 = vld [vmem:[#allocation2 + $0x50] sm:$0xff]
    %v237 = vld [vmem:[#allocation2 + $0x58] sm:$0xff]
    %v238 = vld [vmem:[#allocation2 + $0x60] sm:$0xff]
    %v239 = vld [vmem:[#allocation2 + $0x68] sm:$0xff]
    %v240 = vld [vmem:[#allocation2 + $0x70] sm:$0xff]
    %v241 = vld [vmem:[#allocation2 + $0x78] sm:$0xff]
    %v242 = vld [vmem:[%s6] sm:$0x1]
    %v244 = vlaneseq
    %v245 = vshrl.u32 %v244, 7
    %v246 = vsub.s32 0, %v245
    %v247 = vrot.slane %v242, %v246
    %249 = vmatprep.subr.mxu0 0.0
    %250 = vmatpush1.msra.mxu0 %v226
    %251 = vmatprep.subr.mxu0 0.0
    %252 = vmatpush1.msra.mxu0 %v227
    %253 = vmatprep.subr.mxu0 0.0
    %254 = vmatpush1.msra.mxu0 %v228
    %255 = vmatprep.subr.mxu0 0.0
    %256 = vmatpush1.msra.mxu0 %v229
    %257 = vmatprep.subr.mxu0 0.0
    %258 = vmatpush1.msra.mxu0 %v230
    %259 = vmatprep.subr.mxu0 0.0
    %260 = vmatpush1.msra.mxu0 %v231
    %261 = vmatprep.subr.mxu0 0.0
    %262 = vmatpush1.msra.mxu0 %v232
    %263 = vmatprep.subr.mxu0 0.0
    %264 = vmatpush1.msra.mxu0 %v233
    %265 = vmatprep.subr.mxu0 0.0
    %266 = vmatpush1.msra.mxu0 %v234
    %267 = vmatprep.subr.mxu0 0.0
    %268 = vmatpush1.msra.mxu0 %v235
    %269 = vmatprep.subr.mxu0 0.0
    %270 = vmatpush1.msra.mxu0 %v236
    %271 = vmatprep.subr.mxu0 0.0
    %272 = vmatpush1.msra.mxu0 %v237
    %273 = vmatprep.subr.mxu0 0.0
    %274 = vmatpush1.msra.mxu0 %v238
    %275 = vmatprep.subr.mxu0 0.0
    %276 = vmatpush1.msra.mxu0 %v239
    %277 = vmatprep.subr.mxu0 0.0
    %278 = vmatpush1.msra.mxu0 %v240
    %279 = vmatprep.subr.mxu0 0.0
    %280 = vmatpush1.msra.mxu0 %v241
    %281 = vmatprep.subr.mxu0 0.0
    %282 = vmatpush1.msra.mxu0 0.0
    %283 = vmatprep.subr.mxu0 0.0
    %284 = vmatpush1.msra.mxu0 0.0
    %285 = vmatprep.subr.mxu0 0.0
    %286 = vmatpush1.msra.mxu0 0.0
    %287 = vmatprep.subr.mxu0 0.0
    %288 = vmatpush1.msra.mxu0 0.0
    %289 = vmatprep.subr.mxu0 0.0
    %290 = vmatpush1.msra.mxu0 0.0
    %291 = vmatprep.subr.mxu0 0.0
    %292 = vmatpush1.msra.mxu0 0.0
    %293 = vmatprep.subr.mxu0 0.0
    %294 = vmatpush1.msra.mxu0 0.0
    %295 = vmatprep.subr.mxu0 0.0
    %296 = vmatpush1.msra.mxu0 0.0
    %297 = vmatprep.subr.mxu0 0.0
    %298 = vmatpush1.msra.mxu0 0.0
    %299 = vmatprep.subr.mxu0 0.0
    %300 = vmatpush1.msra.mxu0 0.0
    %301 = vmatprep.subr.mxu0 0.0
    %302 = vmatpush1.msra.mxu0 0.0
    %303 = vmatprep.subr.mxu0 0.0
    %304 = vmatpush1.msra.mxu0 0.0
    %305 = vmatprep.subr.mxu0 0.0
    %306 = vmatpush1.msra.mxu0 0.0
    %307 = vmatprep.subr.mxu0 0.0
    %308 = vmatpush1.msra.mxu0 0.0
    %309 = vmatprep.subr.mxu0 0.0
    %310 = vmatpush1.msra.mxu0 0.0
    %311 = vmatprep.subr.mxu0 0.0
    %312 = vmatpush1.msra.mxu0 0.0
    %313 = vmatprep.mubr.f32.mxu0 0.0
    %314 = vmatmul.mubr.f32.gmra.mrb[0].mxu0 %v224
    %v315 = vpop.f32.mrb[0].mxu0
    %v316 = vadd.f32 %v247, %v315
    %v317 = vpop.f32.mrb[0].mxu0
    %318 = vmatprep.mubr.f32.mxu0 0.0
    %319 = vmatmul.mubr.f32.gmra.mrb[0].mxu0 %v225
    %v320 = vpop.f32.mrb[0].mxu0
    %v321 = vadd.f32 %v247, %v320
    %v322 = vpop.f32.mrb[0].mxu0
    %323 = vdwg.mxu0
    %324 = vst [vmem:[#allocation5] sm:$0xff] %v316
    %325 = vst [vmem:[#allocation5 + $0x8] sm:$0xff] %v321
    // Predicated region
    $region34: #{tpu_custom_call.1} parent=1 // pred_check
      _
    $region35: #{tpu_custom_call.1} parent=1 // pred_check_branch
      %327 = sbr.rel (0) target = $region37
    $region36: #{tpu_custom_call.1} parent=1 // pred_region
      %s329 = ssub.s32 256, 256
      %330 = vsyncadd [#allocation4], %s329
      %s331 = sshll.u32 [#allocation5], 4
      %s332 = int_to_ptr.vmem [resolvable:$true] %s331
      %337 = dma.vmem_to_hbm [thread:$0]  %s332, 256, %s7, [#allocation4], 128, 128, 8
    $region37: #{tpu_custom_call.1} parent=1 // pred_fallthru
      _
    // Predicated region
    $region38: #{tpu_custom_call.1} parent=1 // pred_check
      _
    $region39: #{tpu_custom_call.1} parent=1 // pred_check_branch
      %339 = sbr.rel (0) target = $region41
    $region40: #{tpu_custom_call.1} parent=1 // pred_region
      %340 = dma.done [#allocation4], 256
    $region41: #{tpu_custom_call.1} parent=1 // pred_fallthru
      _
    %341 = vsyncpa [#allocation3], 1
    %342 = vsyncpa [#allocation4], 1

</llo_original>
